<compile_context>
chip_gen: v6e
topology: v6e:2x2x1
jax: 0.10.0
libtpu: 0.0.40
codegen_flags: <defaults>
</compile_context>

<pallas_src>
import functools

import jax
import jax.numpy as jnp
from jax.experimental import pallas as pl
from jax.experimental.pallas import tpu as pltpu

LANE = 128      # last-dim tile granularity
SUBLANE = 8     # second-to-last-dim tile granularity


def _round_up(x, m):
    return (x + m - 1) // m * m


def mlp_kernel(x_ref, w1_ref, b1_ref, w2_ref, b2_ref, w3_ref, b3_ref, o_ref):
    """Fused 3-layer MLP over one (TB, in_pad) batch tile.

    MXU operands are bf16, accumulation is f32; elementwise epilogues stay f32.
    All refs live in VMEM (default memory space for blocked BlockSpecs).
    """
    x = x_ref[...].astype(jnp.bfloat16)

    # layer1 + ReLU
    h1 = jnp.dot(x, w1_ref[...], preferred_element_type=jnp.float32)
    h1 = jnp.maximum(h1 + b1_ref[...], 0.0)

    # layer2 + ReLU
    h2 = jnp.dot(h1.astype(jnp.bfloat16), w2_ref[...],
                 preferred_element_type=jnp.float32)
    h2 = jnp.maximum(h2 + b2_ref[...], 0.0)

    # layer3 (no activation); lane-dense (TB, out_pad) store
    out = jnp.dot(h2.astype(jnp.bfloat16), w3_ref[...],
                  preferred_element_type=jnp.float32)
    o_ref[...] = (out + b3_ref[...]).astype(o_ref.dtype)


@functools.partial(jax.jit, static_argnames=("block_b",))
def feedforward_nn(obs, params, *, block_b=512):
    """Run the fused MLP kernel. obs: (B, in_dim) float32 -> (B, out_dim) float32."""
    w1, b1, w2, b2, w3, b3 = params
    B, in_dim = obs.shape
    hidden1 = w1.shape[1]
    hidden2 = w2.shape[1]
    out_dim = w3.shape[1]

    f32, bf16 = jnp.float32, jnp.bfloat16

    # Lane-dense padded feature dims (multiples of 128).
    in_p = _round_up(in_dim, LANE)
    h1_p = _round_up(hidden1, LANE)
    h2_p = _round_up(hidden2, LANE)
    out_p = _round_up(out_dim, LANE)

    # Batch tile: at most block_b rows, sublane-aligned; batch padded to a
    # multiple of the tile so the grid divides evenly.
    tb = _round_up(min(block_b, _round_up(B, SUBLANE)), SUBLANE)
    b_p = _round_up(B, tb)

    # Zero-pad everything (zeros in padded hidden/input columns contribute
    # nothing; padded output columns are sliced off below).
    x = jnp.zeros((b_p, in_p), f32).at[:B, :in_dim].set(obs.astype(f32))
    w1p = jnp.zeros((in_p, h1_p), bf16).at[:in_dim, :hidden1].set(w1.astype(bf16))
    w2p = jnp.zeros((h1_p, h2_p), bf16).at[:hidden1, :hidden2].set(w2.astype(bf16))
    w3p = jnp.zeros((h2_p, out_p), bf16).at[:hidden2, :out_dim].set(w3.astype(bf16))
    b1p = jnp.zeros((1, h1_p), f32).at[:, :hidden1].set(b1.reshape(1, -1).astype(f32))
    b2p = jnp.zeros((1, h2_p), f32).at[:, :hidden2].set(b2.reshape(1, -1).astype(f32))
    b3p = jnp.zeros((1, out_p), f32).at[:, :out_dim].set(b3.reshape(1, -1).astype(f32))

    grid = (b_p // tb,)
    resident = lambda i: (0, 0)  # weights/biases: same block every step -> stay in VMEM

    out_padded = pl.pallas_call(
        mlp_kernel,
        out_shape=jax.ShapeDtypeStruct((b_p, out_p), f32),
        grid=grid,
        in_specs=[
            pl.BlockSpec((tb, in_p), lambda i: (i, 0)),   # streamed batch tile
            pl.BlockSpec((in_p, h1_p), resident),
            pl.BlockSpec((1, h1_p), resident),
            pl.BlockSpec((h1_p, h2_p), resident),
            pl.BlockSpec((1, h2_p), resident),
            pl.BlockSpec((h2_p, out_p), resident),
            pl.BlockSpec((1, out_p), resident),
        ],
        out_specs=pl.BlockSpec((tb, out_p), lambda i: (i, 0)),
        compiler_params=pltpu.CompilerParams(
            dimension_semantics=("parallel",)),  # megacore-shard the batch axis
    )(x, w1p, b1p, w2p, b2p, w3p, b3p)

    return out_padded[:B, :out_dim]


def init_params(key, in_dim, out_dim, hidden=64):
    """Deterministic parameter init (PyTorch-style uniform fan-in bounds)."""
    ks = jax.random.split(key, 6)

    def linear(kw, kb, fan_in, fan_out):
        bound = 1.0 / jnp.sqrt(fan_in)
        # stored as (in_features, out_features) so the kernel computes x @ W
        w = jax.random.uniform(kw, (fan_in, fan_out), jnp.float32, -bound, bound)
        b = jax.random.uniform(kb, (1, fan_out), jnp.float32, -bound, bound)
        return w, b

    w1, b1 = linear(ks[0], ks[1], in_dim, hidden)
    w2, b2 = linear(ks[2], ks[3], hidden, hidden)
    w3, b3 = linear(ks[4], ks[5], hidden, out_dim)
    return (w1, b1, w2, b2, w3, b3)


if __name__ == "__main__":
    key = jax.random.PRNGKey(0)
    k_obs, k_param = jax.random.split(key)

    # Small, non-multiple batch exercises the grid + pad/slice paths.
    batch, in_dim, out_dim = 200, 16, 4
    obs = jax.random.normal(k_obs, (batch, in_dim), jnp.float32)
    params = init_params(k_param, in_dim, out_dim)

    out = feedforward_nn(obs, params, block_b=64)   # 4 batch tiles of 64 rows
    out = jax.block_until_ready(out)

    # Plain-JAX f32 reference (same math as the PyTorch forward). The kernel
    # feeds the MXU bf16 operands (f32 accumulation), so use a modest tolerance.
    w1, b1, w2, b2, w3, b3 = params
    ref = jnp.maximum(obs @ w1 + b1, 0.0)
    ref = jnp.maximum(ref @ w2 + b2, 0.0)
    ref = ref @ w3 + b3
    assert out.shape == (batch, out_dim)
    assert jnp.allclose(out, ref, atol=3e-2, rtol=3e-2), float(
        jnp.max(jnp.abs(out - ref)))

    print("KERNEL_OK")
</pallas_src>

<mosaic_0001>
module attributes {stable_mosaic.version = 11 : i64} {
  func.func @mlp_kernel(%arg0: i32, %arg1: memref<64x128xf32, #tpu.memory_space<vmem>>, %arg2: memref<128x128xbf16, #tpu.memory_space<vmem>>, %arg3: memref<1x128xf32, #tpu.memory_space<vmem>>, %arg4: memref<128x128xbf16, #tpu.memory_space<vmem>>, %arg5: memref<1x128xf32, #tpu.memory_space<vmem>>, %arg6: memref<128x128xbf16, #tpu.memory_space<vmem>>, %arg7: memref<1x128xf32, #tpu.memory_space<vmem>>, %arg8: memref<64x128xf32, #tpu.memory_space<vmem>>) attributes {dimension_semantics = [#tpu.dimension_semantics<parallel>], iteration_bounds = array<i64: 4>, scalar_prefetch = 0 : i64, scratch_operands = 0 : i64, tpu.core_type = #tpu.core_type<tc>, window_params = [{transform_indices = @transform_0, window_bounds = array<i64: 64, 128>}, {pipeline_mode = #tpu.pipeline_mode<synchronous>, transform_indices = @transform_1, window_bounds = array<i64: 128, 128>}, {pipeline_mode = #tpu.pipeline_mode<synchronous>, transform_indices = @transform_2, window_bounds = array<i64: 1, 128>}, {pipeline_mode = #tpu.pipeline_mode<synchronous>, transform_indices = @transform_3, window_bounds = array<i64: 128, 128>}, {pipeline_mode = #tpu.pipeline_mode<synchronous>, transform_indices = @transform_4, window_bounds = array<i64: 1, 128>}, {pipeline_mode = #tpu.pipeline_mode<synchronous>, transform_indices = @transform_5, window_bounds = array<i64: 128, 128>}, {pipeline_mode = #tpu.pipeline_mode<synchronous>, transform_indices = @transform_6, window_bounds = array<i64: 1, 128>}, {transform_indices = @transform_7, window_bounds = array<i64: 64, 128>}]} {
    %c0 = arith.constant 0 : index
    %c0_0 = arith.constant 0 : index
    %0 = vector.load %arg1[%c0, %c0_0] : memref<64x128xf32, #tpu.memory_space<vmem>>, vector<64x128xf32>
    %1 = arith.truncf %0 : vector<64x128xf32> to vector<64x128xbf16>
    %c0_1 = arith.constant 0 : index
    %c0_2 = arith.constant 0 : index
    %2 = vector.load %arg2[%c0_1, %c0_2] : memref<128x128xbf16, #tpu.memory_space<vmem>>, vector<128x128xbf16>
    %cst = arith.constant dense<0.000000e+00> : vector<64x128xf32>
    %3 = tpu.matmul %1, %2, %cst {dimension_numbers = #tpu.dot_dimension_numbers<[1], [0], [0], [1], [0, 0, 1, 1], [], []>} : vector<64x128xbf16>, vector<128x128xbf16>, vector<64x128xf32> -> vector<64x128xf32>
    %c0_3 = arith.constant 0 : index
    %c0_4 = arith.constant 0 : index
    %4 = vector.load %arg3[%c0_3, %c0_4] : memref<1x128xf32, #tpu.memory_space<vmem>>, vector<1x128xf32>
    %5 = vector.broadcast %4 : vector<1x128xf32> to vector<64x128xf32>
    %6 = arith.addf %3, %5 : vector<64x128xf32>
    %cst_5 = arith.constant 0.000000e+00 : f32
    %7 = vector.broadcast %cst_5 : f32 to vector<64x128xf32>
    %8 = arith.maximumf %6, %7 : vector<64x128xf32>
    %9 = arith.truncf %8 : vector<64x128xf32> to vector<64x128xbf16>
    %c0_6 = arith.constant 0 : index
    %c0_7 = arith.constant 0 : index
    %10 = vector.load %arg4[%c0_6, %c0_7] : memref<128x128xbf16, #tpu.memory_space<vmem>>, vector<128x128xbf16>
    %cst_8 = arith.constant dense<0.000000e+00> : vector<64x128xf32>
    %11 = tpu.matmul %9, %10, %cst_8 {dimension_numbers = #tpu.dot_dimension_numbers<[1], [0], [0], [1], [0, 0, 1, 1], [], []>} : vector<64x128xbf16>, vector<128x128xbf16>, vector<64x128xf32> -> vector<64x128xf32>
    %c0_9 = arith.constant 0 : index
    %c0_10 = arith.constant 0 : index
    %12 = vector.load %arg5[%c0_9, %c0_10] : memref<1x128xf32, #tpu.memory_space<vmem>>, vector<1x128xf32>
    %13 = vector.broadcast %12 : vector<1x128xf32> to vector<64x128xf32>
    %14 = arith.addf %11, %13 : vector<64x128xf32>
    %cst_11 = arith.constant 0.000000e+00 : f32
    %15 = vector.broadcast %cst_11 : f32 to vector<64x128xf32>
    %16 = arith.maximumf %14, %15 : vector<64x128xf32>
    %17 = arith.truncf %16 : vector<64x128xf32> to vector<64x128xbf16>
    %c0_12 = arith.constant 0 : index
    %c0_13 = arith.constant 0 : index
    %18 = vector.load %arg6[%c0_12, %c0_13] : memref<128x128xbf16, #tpu.memory_space<vmem>>, vector<128x128xbf16>
    %cst_14 = arith.constant dense<0.000000e+00> : vector<64x128xf32>
    %19 = tpu.matmul %17, %18, %cst_14 {dimension_numbers = #tpu.dot_dimension_numbers<[1], [0], [0], [1], [0, 0, 1, 1], [], []>} : vector<64x128xbf16>, vector<128x128xbf16>, vector<64x128xf32> -> vector<64x128xf32>
    %c0_15 = arith.constant 0 : index
    %c0_16 = arith.constant 0 : index
    %20 = vector.load %arg7[%c0_15, %c0_16] : memref<1x128xf32, #tpu.memory_space<vmem>>, vector<1x128xf32>
    %21 = vector.broadcast %20 : vector<1x128xf32> to vector<64x128xf32>
    %22 = arith.addf %19, %21 : vector<64x128xf32>
    %c0_17 = arith.constant 0 : index
    %c0_18 = arith.constant 0 : index
    %23 = vector.load %arg8[%c0_17, %c0_18] : memref<64x128xf32, #tpu.memory_space<vmem>>, vector<64x128xf32>
    tpu.vector_store %arg8[%c0_17, %c0_18], %22 {strides = array<i32>} : memref<64x128xf32, #tpu.memory_space<vmem>>, vector<64x128xf32>,
    return
  }
  func.func @transform_0(%arg0: i32) -> (i32, i32) {
    %c0_i32 = arith.constant 0 : i32
    %c0_i32_0 = arith.constant 0 : i32
    return %arg0, %c0_i32 : i32, i32
  }
  func.func @transform_1(%arg0: i32) -> (i32, i32) {
    %c0_i32 = arith.constant 0 : i32
    %c0_i32_0 = arith.constant 0 : i32
    %c0_i32_1 = arith.constant 0 : i32
    return %c0_i32, %c0_i32_0 : i32, i32
  }
  func.func @transform_2(%arg0: i32) -> (i32, i32) {
    %c0_i32 = arith.constant 0 : i32
    %c0_i32_0 = arith.constant 0 : i32
    %c0_i32_1 = arith.constant 0 : i32
    return %c0_i32, %c0_i32_0 : i32, i32
  }
  func.func @transform_3(%arg0: i32) -> (i32, i32) {
    %c0_i32 = arith.constant 0 : i32
    %c0_i32_0 = arith.constant 0 : i32
    %c0_i32_1 = arith.constant 0 : i32
    return %c0_i32, %c0_i32_0 : i32, i32
  }
  func.func @transform_4(%arg0: i32) -> (i32, i32) {
    %c0_i32 = arith.constant 0 : i32
    %c0_i32_0 = arith.constant 0 : i32
    %c0_i32_1 = arith.constant 0 : i32
    return %c0_i32, %c0_i32_0 : i32, i32
  }
  func.func @transform_5(%arg0: i32) -> (i32, i32) {
    %c0_i32 = arith.constant 0 : i32
    %c0_i32_0 = arith.constant 0 : i32
    %c0_i32_1 = arith.constant 0 : i32
    return %c0_i32, %c0_i32_0 : i32, i32
  }
  func.func @transform_6(%arg0: i32) -> (i32, i32) {
    %c0_i32 = arith.constant 0 : i32
    %c0_i32_0 = arith.constant 0 : i32
    %c0_i32_1 = arith.constant 0 : i32
    return %c0_i32, %c0_i32_0 : i32, i32
  }
  func.func @transform_7(%arg0: i32) -> (i32, i32) {
    %c0_i32 = arith.constant 0 : i32
    %c0_i32_0 = arith.constant 0 : i32
    return %arg0, %c0_i32 : i32, i32
  }
}

</mosaic_0001>

<llo_original>
// kernel: feedforward_nn.1
$region0: #{feedforward_nn.1}
  #allocation0 [shape = 'u32[]', space=smem, size = 0x4, offset = 0x4, fixed_abs, tag = 'smem constant byte address 0x4 - core index']
  #allocation1 [shape = 'u32[144,128]{1,0:T(1,128)}', space=vmem, size = 0x12000, scoped, tag = 'internal scratch']
  %s0 = inlined_call_operand.vmem [shape: f32[256,128], index: 0, kind: input, shape index: {}]
  %s1 = inlined_call_operand.vmem [shape: bf16[128,128], index: 1, kind: input, shape index: {}]
  %s2 = inlined_call_operand.vmem [shape: f32[1,128], index: 2, kind: input, shape index: {}]
  %s3 = inlined_call_operand.vmem [shape: bf16[128,128], index: 3, kind: input, shape index: {}]
  %s4 = inlined_call_operand.vmem [shape: f32[1,128], index: 4, kind: input, shape index: {}]
  %s5 = inlined_call_operand.vmem [shape: bf16[128,128], index: 5, kind: input, shape index: {}]
  %s6 = inlined_call_operand.vmem [shape: f32[1,128], index: 6, kind: input, shape index: {}]
  %s7 = inlined_call_operand.vmem [shape: f32[256,128], index: 7, kind: output, shape index: {}]
  %s8 = sld [smem:[#allocation0]]
  $region61: #{feedforward_nn.1} parent=0
    _
  %s10 = ssub.s32 1, %s8
  %s11 = scalar_select 0, %s10, %s8
  loop: start=0, step=1, limit=6
  $region2: #{feedforward_nn.1} parent=0 // loop_pre_header
    _
  $region3: #{feedforward_nn.1} parent=0 // loop_header
    %s13 = sphi 0, %s17
    %p14 = scmp.ge.s32.totalorder %s13, 6
    %s23 = sphi 0, %s25
    %s26 = sphi 0, %s23
    %s27 = sphi 0, %s26
    %s43 = sphi 0, %s27
    %s47 = sphi 0, %s47
    %s49 = sphi 0, %s47
    %s50 = sphi 0, %s49
    %s64 = sphi 0, %s50
    %s68 = sphi 0, %s68
    %s70 = sphi 0, %s68
    %s71 = sphi 0, %s70
    %s85 = sphi 0, %s71
    %s89 = sphi 0, %s89
    %s91 = sphi 0, %s89
    %s92 = sphi 0, %s91
    %s106 = sphi 0, %s92
    %s110 = sphi 0, %s110
    %s112 = sphi 0, %s110
    %s113 = sphi 0, %s112
    %s127 = sphi 0, %s113
    %s131 = sphi 0, %s131
    %s133 = sphi 0, %s131
    %s134 = sphi 0, %s133
    %s148 = sphi 0, %s134
    %s152 = sphi 0, %s152
    %s154 = sphi 0, %s152
    %s155 = sphi 0, %s154
    %s169 = sphi 0, %s155
    %s175 = sphi 0, %s177
    %s178 = sphi 0, %s175
    %s179 = sphi 0, %s178
    %s195 = sphi 0, %s179
  $region4: #{feedforward_nn.1} parent=0 // loop_header_branch
    %16 = sbr.rel (%p14) target = $region8
  $region5: #{feedforward_nn.1} parent=0 // loop_body
    %s18 = ssub.s32 %s13, 1
    %s19 = ssub.s32 %s13, 2
    %s20 = sadd.s32 %s13, 1
    %s21 = ssub.s32 %s13, %s20
    %p22 = scmp.eq.s32.totalorder %s21, 0
    %s24 = sadd.s32 %s23, 1
    %s25 = scalar_select %p22, %s23, %s24
    %p28 = pneg %p22
    %p29 = scmp.eq.s32.totalorder %s13, 3
    %p30 = por %p28, %p29
    %p31 = scmp.ne.s32.totalorder %s23, %s26
    %p32 = scmp.eq.s32.totalorder %s13, 0
    %p33 = por %p31, %p32
    %p34 = scmp.ne.s32.totalorder %s23, %s26
    %p35 = scmp.eq.s32.totalorder %s18, 3
    %p36 = por %p34, %p35
    %p37 = scmp.ne.s32.totalorder %s26, %s27
    %p38 = scmp.eq.s32.totalorder %s18, 0
    %p39 = por %p37, %p38
    %p40 = scmp.ne.s32.totalorder %s26, %s27
    %p41 = scmp.eq.s32.totalorder %s19, 3
    %p42 = por %p40, %p41
    %p44 = scmp.ne.s32.totalorder %s27, %s43
    %p45 = scmp.eq.s32.totalorder %s19, 0
    %p46 = por %p44, %p45
    %s48 = sadd.s32 %s47, 1
    %p51 = scmp.eq.s32.totalorder %s13, 3
    %p52 = scmp.ne.s32.totalorder %s47, %s49
    %p53 = scmp.eq.s32.totalorder %s13, 0
    %p54 = por %p52, %p53
    %p55 = scmp.ne.s32.totalorder %s47, %s49
    %p56 = scmp.eq.s32.totalorder %s18, 3
    %p57 = por %p55, %p56
    %p58 = scmp.ne.s32.totalorder %s49, %s50
    %p59 = scmp.eq.s32.totalorder %s18, 0
    %p60 = por %p58, %p59
    %p61 = scmp.ne.s32.totalorder %s49, %s50
    %p62 = scmp.eq.s32.totalorder %s19, 3
    %p63 = por %p61, %p62
    %p65 = scmp.ne.s32.totalorder %s50, %s64
    %p66 = scmp.eq.s32.totalorder %s19, 0
    %p67 = por %p65, %p66
    %s69 = sadd.s32 %s68, 1
    %p72 = scmp.eq.s32.totalorder %s13, 3
    %p73 = scmp.ne.s32.totalorder %s68, %s70
    %p74 = scmp.eq.s32.totalorder %s13, 0
    %p75 = por %p73, %p74
    %p76 = scmp.ne.s32.totalorder %s68, %s70
    %p77 = scmp.eq.s32.totalorder %s18, 3
    %p78 = por %p76, %p77
    %p79 = scmp.ne.s32.totalorder %s70, %s71
    %p80 = scmp.eq.s32.totalorder %s18, 0
    %p81 = por %p79, %p80
    %p82 = scmp.ne.s32.totalorder %s70, %s71
    %p83 = scmp.eq.s32.totalorder %s19, 3
    %p84 = por %p82, %p83
    %p86 = scmp.ne.s32.totalorder %s71, %s85
    %p87 = scmp.eq.s32.totalorder %s19, 0
    %p88 = por %p86, %p87
    %s90 = sadd.s32 %s89, 1
    %p93 = scmp.eq.s32.totalorder %s13, 3
    %p94 = scmp.ne.s32.totalorder %s89, %s91
    %p95 = scmp.eq.s32.totalorder %s13, 0
    %p96 = por %p94, %p95
    %p97 = scmp.ne.s32.totalorder %s89, %s91
    %p98 = scmp.eq.s32.totalorder %s18, 3
    %p99 = por %p97, %p98
    %p100 = scmp.ne.s32.totalorder %s91, %s92
    %p101 = scmp.eq.s32.totalorder %s18, 0
    %p102 = por %p100, %p101
    %p103 = scmp.ne.s32.totalorder %s91, %s92
    %p104 = scmp.eq.s32.totalorder %s19, 3
    %p105 = por %p103, %p104
    %p107 = scmp.ne.s32.totalorder %s92, %s106
    %p108 = scmp.eq.s32.totalorder %s19, 0
    %p109 = por %p107, %p108
    %s111 = sadd.s32 %s110, 1
    %p114 = scmp.eq.s32.totalorder %s13, 3
    %p115 = scmp.ne.s32.totalorder %s110, %s112
    %p116 = scmp.eq.s32.totalorder %s13, 0
    %p117 = por %p115, %p116
    %p118 = scmp.ne.s32.totalorder %s110, %s112
    %p119 = scmp.eq.s32.totalorder %s18, 3
    %p120 = por %p118, %p119
    %p121 = scmp.ne.s32.totalorder %s112, %s113
    %p122 = scmp.eq.s32.totalorder %s18, 0
    %p123 = por %p121, %p122
    %p124 = scmp.ne.s32.totalorder %s112, %s113
    %p125 = scmp.eq.s32.totalorder %s19, 3
    %p126 = por %p124, %p125
    %p128 = scmp.ne.s32.totalorder %s113, %s127
    %p129 = scmp.eq.s32.totalorder %s19, 0
    %p130 = por %p128, %p129
    %s132 = sadd.s32 %s131, 1
    %p135 = scmp.eq.s32.totalorder %s13, 3
    %p136 = scmp.ne.s32.totalorder %s131, %s133
    %p137 = scmp.eq.s32.totalorder %s13, 0
    %p138 = por %p136, %p137
    %p139 = scmp.ne.s32.totalorder %s131, %s133
    %p140 = scmp.eq.s32.totalorder %s18, 3
    %p141 = por %p139, %p140
    %p142 = scmp.ne.s32.totalorder %s133, %s134
    %p143 = scmp.eq.s32.totalorder %s18, 0
    %p144 = por %p142, %p143
    %p145 = scmp.ne.s32.totalorder %s133, %s134
    %p146 = scmp.eq.s32.totalorder %s19, 3
    %p147 = por %p145, %p146
    %p149 = scmp.ne.s32.totalorder %s134, %s148
    %p150 = scmp.eq.s32.totalorder %s19, 0
    %p151 = por %p149, %p150
    %s153 = sadd.s32 %s152, 1
    %p156 = scmp.eq.s32.totalorder %s13, 3
    %p157 = scmp.ne.s32.totalorder %s152, %s154
    %p158 = scmp.eq.s32.totalorder %s13, 0
    %p159 = por %p157, %p158
    %p160 = scmp.ne.s32.totalorder %s152, %s154
    %p161 = scmp.eq.s32.totalorder %s18, 3
    %p162 = por %p160, %p161
    %p163 = scmp.ne.s32.totalorder %s154, %s155
    %p164 = scmp.eq.s32.totalorder %s18, 0
    %p165 = por %p163, %p164
    %p166 = scmp.ne.s32.totalorder %s154, %s155
    %p167 = scmp.eq.s32.totalorder %s19, 3
    %p168 = por %p166, %p167
    %p170 = scmp.ne.s32.totalorder %s155, %s169
    %p171 = scmp.eq.s32.totalorder %s19, 0
    %p172 = por %p170, %p171
    %s173 = ssub.s32 %s13, %s20
    %p174 = scmp.eq.s32.totalorder %s173, 0
    %s176 = sadd.s32 %s175, 1
    %s177 = scalar_select %p174, %s175, %s176
    %p180 = pneg %p174
    %p181 = scmp.eq.s32.totalorder %s13, 3
    %p182 = por %p180, %p181
    %p183 = scmp.ne.s32.totalorder %s175, %s178
    %p184 = scmp.eq.s32.totalorder %s13, 0
    %p185 = por %p183, %p184
    %p186 = scmp.ne.s32.totalorder %s175, %s178
    %p187 = scmp.eq.s32.totalorder %s18, 3
    %p188 = por %p186, %p187
    %p189 = scmp.ne.s32.totalorder %s178, %s179
    %p190 = scmp.eq.s32.totalorder %s18, 0
    %p191 = por %p189, %p190
    %p192 = scmp.ne.s32.totalorder %s178, %s179
    %p193 = scmp.eq.s32.totalorder %s19, 3
    %p194 = por %p192, %p193
    %p196 = scmp.ne.s32.totalorder %s179, %s195
    %p197 = scmp.eq.s32.totalorder %s19, 0
    %p198 = por %p196, %p197
    %p199 = scmp.le.s32.totalorder 1, %s13
    %p200 = scmp.lt.s32.totalorder %s13, 5
    %p201 = pnand %p199, %p200
    %p202 = pneg %p201
    // Predicated region
    $region9: #{feedforward_nn.1} parent=5 // pred_check
      _
    $region10: #{feedforward_nn.1} parent=5 // pred_check_branch
      %204 = sbr.rel (%p201) target = $region12
    $region11: #{feedforward_nn.1} parent=5 // pred_region
      %s205 = ssub.s32 %s13, 1
      // Predicated region
      $region13: #{feedforward_nn.1} parent=11 // pred_check
        %p206 = pneg %p60
      $region14: #{feedforward_nn.1} parent=11 // pred_check_branch
        %208 = sbr.rel (%p206) target = $region16
      $region15: #{feedforward_nn.1} parent=11 // pred_region
        _
      $region16: #{feedforward_nn.1} parent=11 // pred_fallthru
        _
      // Predicated region
      $region17: #{feedforward_nn.1} parent=11 // pred_check
        %p209 = pneg %p81
      $region18: #{feedforward_nn.1} parent=11 // pred_check_branch
        %211 = sbr.rel (%p209) target = $region20
      $region19: #{feedforward_nn.1} parent=11 // pred_region
        _
      $region20: #{feedforward_nn.1} parent=11 // pred_fallthru
        _
      // Predicated region
      $region21: #{feedforward_nn.1} parent=11 // pred_check
        %p212 = pneg %p102
      $region22: #{feedforward_nn.1} parent=11 // pred_check_branch
        %214 = sbr.rel (%p212) target = $region24
      $region23: #{feedforward_nn.1} parent=11 // pred_region
        _
      $region24: #{feedforward_nn.1} parent=11 // pred_fallthru
        _
      // Predicated region
      $region25: #{feedforward_nn.1} parent=11 // pred_check
        %p215 = pneg %p123
      $region26: #{feedforward_nn.1} parent=11 // pred_check_branch
        %217 = sbr.rel (%p215) target = $region28
      $region27: #{feedforward_nn.1} parent=11 // pred_region
        _
      $region28: #{feedforward_nn.1} parent=11 // pred_fallthru
        _
      // Predicated region
      $region29: #{feedforward_nn.1} parent=11 // pred_check
        %p218 = pneg %p144
      $region30: #{feedforward_nn.1} parent=11 // pred_check_branch
        %220 = sbr.rel (%p218) target = $region32
      $region31: #{feedforward_nn.1} parent=11 // pred_region
        _
      $region32: #{feedforward_nn.1} parent=11 // pred_fallthru
        _
      // Predicated region
      $region33: #{feedforward_nn.1} parent=11 // pred_check
        %p221 = pneg %p165
      $region34: #{feedforward_nn.1} parent=11 // pred_check_branch
        %223 = sbr.rel (%p221) target = $region36
      $region35: #{feedforward_nn.1} parent=11 // pred_region
        _
      $region36: #{feedforward_nn.1} parent=11 // pred_fallthru
        _
    $region12: #{feedforward_nn.1} parent=5 // pred_fallthru
      _
    %p224 = scmp.lt.s32.totalorder %s13, 4
    // Predicated region
    $region37: #{feedforward_nn.1} parent=5 // pred_check
      %p225 = pneg %p224
    $region38: #{feedforward_nn.1} parent=5 // pred_check_branch
      %227 = sbr.rel (%p225) target = $region40
    $region39: #{feedforward_nn.1} parent=5 // pred_region
      // Predicated region
      $region41: #{feedforward_nn.1} parent=39 // pred_check
        %p228 = pneg %p33
      $region42: #{feedforward_nn.1} parent=39 // pred_check_branch
        %230 = sbr.rel (%p228) target = $region44
      $region43: #{feedforward_nn.1} parent=39 // pred_region
        %s231 = smul.u32 8, %s13
        %p232 = scmp.lt.s32.totalorder %s231, 31
        %s233 = scalar_select %p232, %s231, 31
        %s234 = smul.addr %s233, 8
        %s235 = scalar_lea.vmem %s0, %s234
        %s236 = smul.u32 8, %s13
      $region44: #{feedforward_nn.1} parent=39 // pred_fallthru
        _
    $region40: #{feedforward_nn.1} parent=5 // pred_fallthru
      _
    %p237 = scmp.le.s32.totalorder 1, %s13
    %p238 = scmp.lt.s32.totalorder %s13, 5
    %p239 = pnand %p237, %p238
    %p240 = pneg %p239
    // Predicated region
    $region45: #{feedforward_nn.1} parent=5 // pred_check
      _
    $region46: #{feedforward_nn.1} parent=5 // pred_check_branch
      %242 = sbr.rel (%p239) target = $region48
    $region47: #{feedforward_nn.1} parent=5 // pred_region
      %s243 = ssub.s32 %s13, 1
      %s244 = smul.u32 8, %s18
      %p245 = scmp.lt.s32.totalorder %s244, 31
      %s246 = scalar_select %p245, %s244, 31
      %s247 = smul.addr %s246, 8
      %s248 = scalar_lea.vmem %s0, %s247
      %p249 = pneg %p39
      %p250 = pneg %p36
      %p251 = pneg %p60
      %p252 = pneg %p57
      %p253 = pneg %p81
      %p254 = pneg %p78
      %p255 = pneg %p102
      %p256 = pneg %p99
      %p257 = pneg %p123
      %p258 = pneg %p120
      %p259 = pneg %p144
      %p260 = pneg %p141
      %p261 = pneg %p165
      %p262 = pneg %p162
      %p263 = pneg %p191
      %p264 = pneg %p188
      %s265 = smul.u32 8, %s18
      %p266 = scmp.lt.s32.totalorder %s265, 31
      %s267 = scalar_select %p266, %s265, 31
      %s268 = smul.addr %s267, 8
      %s269 = scalar_lea.vmem %s7, %s268
      %s270 = smul.u32 8, %s18
      %p271 = scmp.lt.s32.totalorder %s270, 31
      %s272 = scalar_select %p271, %s270, 31
      %s273 = smul.addr %s272, 8
      %s274 = scalar_lea.vmem %s0, %s273
      %s275 = smul.u32 8, %s18
      %s276 = smul.u32 8, %s18
      %p277 = scmp.lt.s32.totalorder %s276, 31
      %s278 = scalar_select %p277, %s276, 31
      %s279 = smul.addr %s278, 8
      %s280 = scalar_lea.vmem %s7, %s279
      %s281 = smul.u32 8, %s18
      %v283 = vld [vmem:[%s274] sm:$0xff]
      %v284 = vld [vmem:[%s274 + $0x8] sm:$0xff]
      %v285 = vld [vmem:[%s274 + $0x10] sm:$0xff]
      %v286 = vld [vmem:[%s274 + $0x18] sm:$0xff]
      %v287 = vld [vmem:[%s274 + $0x20] sm:$0xff]
      %v288 = vld [vmem:[%s274 + $0x28] sm:$0xff]
      %v289 = vld [vmem:[%s274 + $0x30] sm:$0xff]
      %v290 = vld [vmem:[%s274 + $0x38] sm:$0xff]
      %v291 = vpack.c.bf16 %v284, %v283
      %v292 = vpack.c.bf16 %v286, %v285
      %v293 = vpack.c.bf16 %v288, %v287
      %v294 = vpack.c.bf16 %v290, %v289
      %v295 = vld [vmem:[%s1] sm:$0xf]
      %v296 = vld [vmem:[%s1 + $0x4] sm:$0xf]
      %v297 = vld [vmem:[%s1 + $0x8] sm:$0xf]
      %v298 = vld [vmem:[%s1 + $0xc] sm:$0xf]
      %v299 = vld [vmem:[%s1 + $0x10] sm:$0xf]
      %v300 = vld [vmem:[%s1 + $0x14] sm:$0xf]
      %v301 = vld [vmem:[%s1 + $0x18] sm:$0xf]
      %v302 = vld [vmem:[%s1 + $0x1c] sm:$0xf]
      %v303 = vld [vmem:[%s1 + $0x20] sm:$0xf]
      %v304 = vld [vmem:[%s1 + $0x24] sm:$0xf]
      %v305 = vld [vmem:[%s1 + $0x28] sm:$0xf]
      %v306 = vld [vmem:[%s1 + $0x2c] sm:$0xf]
      %v307 = vld [vmem:[%s1 + $0x30] sm:$0xf]
      %v308 = vld [vmem:[%s1 + $0x34] sm:$0xf]
      %v309 = vld [vmem:[%s1 + $0x38] sm:$0xf]
      %v310 = vld [vmem:[%s1 + $0x3c] sm:$0xf]
      %v311 = vld [vmem:[%s2] sm:$0x1]
      %v313 = vlaneseq
      %v314 = vshrl.u32 %v313, 7
      %v315 = vsub.s32 0, %v314
      %v316 = vrot.slane %v311, %v315
      %v334 = vunpack.c.l.b16 %v295
      %v335 = vunpack.c.l.b16 %v296
      %v336 = vunpack.c.l.b16 %v297
      %v337 = vunpack.c.l.b16 %v298
      %v338 = vunpack.c.l.b16 %v299
      %v339 = vunpack.c.l.b16 %v300
      %v340 = vunpack.c.l.b16 %v301
      %v341 = vunpack.c.l.b16 %v302
      %v342 = vunpack.c.l.b16 %v303
      %v343 = vunpack.c.l.b16 %v304
      %v344 = vunpack.c.l.b16 %v305
      %v345 = vunpack.c.l.b16 %v306
      %v346 = vunpack.c.l.b16 %v307
      %v347 = vunpack.c.l.b16 %v308
      %v348 = vunpack.c.l.b16 %v309
      %v349 = vunpack.c.l.b16 %v310
      %v350 = vpack.c.b16 %v335, %v334
      %v351 = vpack.c.b16 %v337, %v336
      %v352 = vpack.c.b16 %v339, %v338
      %v353 = vpack.c.b16 %v341, %v340
      %v354 = vpack.c.b16 %v343, %v342
      %v355 = vpack.c.b16 %v345, %v344
      %v356 = vpack.c.b16 %v347, %v346
      %v357 = vpack.c.b16 %v349, %v348
      %366 = vmatprep.subr.bf16.mxu0 0
      %367 = vmatpush1.bf16.msra.mxu0 %v357
      %368 = vmatprep.subr.bf16.mxu0 0
      %369 = vmatpush1.bf16.msra.mxu0 %v356
      %370 = vmatprep.subr.bf16.mxu0 0
      %371 = vmatpush1.bf16.msra.mxu0 %v355
      %372 = vmatprep.subr.bf16.mxu0 0
      %373 = vmatpush1.bf16.msra.mxu0 %v354
      %374 = vmatprep.subr.bf16.mxu0 0
      %375 = vmatpush1.bf16.msra.mxu0 %v353
      %376 = vmatprep.subr.bf16.mxu0 0
      %377 = vmatpush1.bf16.msra.mxu0 %v352
      %378 = vmatprep.subr.bf16.mxu0 0
      %379 = vmatpush1.bf16.msra.mxu0 %v351
      %380 = vmatprep.subr.bf16.mxu0 0
      %381 = vmatpush1.bf16.msra.mxu0 %v350
      %382 = vmatprep.subr.bf16.mxu0 0
      %383 = vmatpush2.bf16.msra.mxu0 0
      %384 = vmatprep.subr.bf16.mxu0 0
      %385 = vmatpush2.bf16.msra.mxu0 0
      %386 = vmatprep.subr.bf16.mxu0 0
      %387 = vmatpush2.bf16.msra.mxu0 0
      %388 = vmatprep.subr.bf16.mxu0 0
      %389 = vmatpush2.bf16.msra.mxu0 0
      %390 = vmatprep.subr.bf16.mxu0 0
      %391 = vmatpush2.bf16.msra.mxu0 0
      %392 = vmatprep.subr.bf16.mxu0 0
      %393 = vmatpush2.bf16.msra.mxu0 0
      %394 = vmatprep.subr.bf16.mxu0 0
      %395 = vmatpush2.bf16.msra.mxu0 0
      %396 = vmatprep.subr.bf16.mxu0 0
      %397 = vmatpush2.bf16.msra.mxu0 0
      %398 = vmatprep.mubr.bf16.mxu0 0
      %399 = vmatmul.mubr.bf16.gmra.mxu0 %v291
      %v400 = vpop.f32.mrf.mxu0
      %v401 = vadd.f32 %v316, %v400
      %v402 = vpop.f32.mrf.mxu0
      %v403 = vpop.f32.mrf.mxu0
      %v404 = vadd.f32 %v316, %v403
      %v405 = vpop.f32.mrf.mxu0
      %406 = vmatprep.mubr.bf16.mxu0 0
      %407 = vmatmul.mubr.bf16.gmra.mxu0 %v292
      %v408 = vpop.f32.mrf.mxu0
      %v409 = vadd.f32 %v316, %v408
      %v410 = vpop.f32.mrf.mxu0
      %v411 = vpop.f32.mrf.mxu0
      %v412 = vadd.f32 %v316, %v411
      %v413 = vpop.f32.mrf.mxu0
      %414 = vmatprep.mubr.bf16.mxu0 0
      %415 = vmatmul.mubr.bf16.gmra.mxu0 %v293
      %v416 = vpop.f32.mrf.mxu0
      %v417 = vadd.f32 %v316, %v416
      %v418 = vpop.f32.mrf.mxu0
      %v419 = vpop.f32.mrf.mxu0
      %v420 = vadd.f32 %v316, %v419
      %v421 = vpop.f32.mrf.mxu0
      %422 = vmatprep.mubr.bf16.mxu0 0
      %423 = vmatmul.mubr.bf16.gmra.mxu0 %v294
      %v424 = vpop.f32.mrf.mxu0
      %v425 = vadd.f32 %v316, %v424
      %v426 = vpop.f32.mrf.mxu0
      %v427 = vpop.f32.mrf.mxu0
      %v428 = vadd.f32 %v316, %v427
      %v429 = vpop.f32.mrf.mxu0
      %430 = vdwg.mxu0
      %v431 = vmax.f32 %v401, 0.0
      %v432 = vmax.f32 %v404, 0.0
      %v433 = vmax.f32 %v409, 0.0
      %v434 = vmax.f32 %v412, 0.0
      %v435 = vmax.f32 %v417, 0.0
      %v436 = vmax.f32 %v420, 0.0
      %v437 = vmax.f32 %v425, 0.0
      %v438 = vmax.f32 %v428, 0.0
      %v439 = vpack.c.bf16 %v432, %v431
      %v440 = vpack.c.bf16 %v434, %v433
      %v441 = vpack.c.bf16 %v436, %v435
      %v442 = vpack.c.bf16 %v438, %v437
      %v443 = vld [vmem:[%s3] sm:$0xf]
      %v444 = vld [vmem:[%s3 + $0x4] sm:$0xf]
      %v445 = vld [vmem:[%s3 + $0x8] sm:$0xf]
      %v446 = vld [vmem:[%s3 + $0xc] sm:$0xf]
      %v447 = vld [vmem:[%s3 + $0x10] sm:$0xf]
      %v448 = vld [vmem:[%s3 + $0x14] sm:$0xf]
      %v449 = vld [vmem:[%s3 + $0x18] sm:$0xf]
      %v450 = vld [vmem:[%s3 + $0x1c] sm:$0xf]
      %v451 = vld [vmem:[%s3 + $0x20] sm:$0xf]
      %v452 = vld [vmem:[%s3 + $0x24] sm:$0xf]
      %v453 = vld [vmem:[%s3 + $0x28] sm:$0xf]
      %v454 = vld [vmem:[%s3 + $0x2c] sm:$0xf]
      %v455 = vld [vmem:[%s3 + $0x30] sm:$0xf]
      %v456 = vld [vmem:[%s3 + $0x34] sm:$0xf]
      %v457 = vld [vmem:[%s3 + $0x38] sm:$0xf]
      %v458 = vld [vmem:[%s3 + $0x3c] sm:$0xf]
      %v459 = vld [vmem:[%s4] sm:$0x1]
      %v461 = vlaneseq
      %v462 = vshrl.u32 %v461, 7
      %v463 = vsub.s32 0, %v462
      %v464 = vrot.slane %v459, %v463
      %v482 = vunpack.c.l.b16 %v443
      %v483 = vunpack.c.l.b16 %v444
      %v484 = vunpack.c.l.b16 %v445
      %v485 = vunpack.c.l.b16 %v446
      %v486 = vunpack.c.l.b16 %v447
      %v487 = vunpack.c.l.b16 %v448
      %v488 = vunpack.c.l.b16 %v449
      %v489 = vunpack.c.l.b16 %v450
      %v490 = vunpack.c.l.b16 %v451
      %v491 = vunpack.c.l.b16 %v452
      %v492 = vunpack.c.l.b16 %v453
      %v493 = vunpack.c.l.b16 %v454
      %v494 = vunpack.c.l.b16 %v455
      %v495 = vunpack.c.l.b16 %v456
      %v496 = vunpack.c.l.b16 %v457
      %v497 = vunpack.c.l.b16 %v458
      %v498 = vpack.c.b16 %v483, %v482
      %v499 = vpack.c.b16 %v485, %v484
      %v500 = vpack.c.b16 %v487, %v486
      %v501 = vpack.c.b16 %v489, %v488
      %v502 = vpack.c.b16 %v491, %v490
      %v503 = vpack.c.b16 %v493, %v492
      %v504 = vpack.c.b16 %v495, %v494
      %v505 = vpack.c.b16 %v497, %v496
      %514 = vmatprep.subr.bf16.mxu0 0
      %515 = vmatpush1.bf16.msra.mxu0 %v505
      %516 = vmatprep.subr.bf16.mxu0 0
      %517 = vmatpush1.bf16.msra.mxu0 %v504
      %518 = vmatprep.subr.bf16.mxu0 0
      %519 = vmatpush1.bf16.msra.mxu0 %v503
      %520 = vmatprep.subr.bf16.mxu0 0
      %521 = vmatpush1.bf16.msra.mxu0 %v502
      %522 = vmatprep.subr.bf16.mxu0 0
      %523 = vmatpush1.bf16.msra.mxu0 %v501
      %524 = vmatprep.subr.bf16.mxu0 0
      %525 = vmatpush1.bf16.msra.mxu0 %v500
      %526 = vmatprep.subr.bf16.mxu0 0
      %527 = vmatpush1.bf16.msra.mxu0 %v499
      %528 = vmatprep.subr.bf16.mxu0 0
      %529 = vmatpush1.bf16.msra.mxu0 %v498
      %530 = vmatprep.subr.bf16.mxu0 0
      %531 = vmatpush2.bf16.msra.mxu0 0
      %532 = vmatprep.subr.bf16.mxu0 0
      %533 = vmatpush2.bf16.msra.mxu0 0
      %534 = vmatprep.subr.bf16.mxu0 0
      %535 = vmatpush2.bf16.msra.mxu0 0
      %536 = vmatprep.subr.bf16.mxu0 0
      %537 = vmatpush2.bf16.msra.mxu0 0
      %538 = vmatprep.subr.bf16.mxu0 0
      %539 = vmatpush2.bf16.msra.mxu0 0
      %540 = vmatprep.subr.bf16.mxu0 0
      %541 = vmatpush2.bf16.msra.mxu0 0
      %542 = vmatprep.subr.bf16.mxu0 0
      %543 = vmatpush2.bf16.msra.mxu0 0
      %544 = vmatprep.subr.bf16.mxu0 0
      %545 = vmatpush2.bf16.msra.mxu0 0
      %546 = vmatprep.mubr.bf16.mxu0 0
      %547 = vmatmul.mubr.bf16.gmra.mxu0 %v439
      %v548 = vpop.f32.mrf.mxu0
      %v549 = vadd.f32 %v464, %v548
      %v550 = vpop.f32.mrf.mxu0
      %v551 = vpop.f32.mrf.mxu0
      %v552 = vadd.f32 %v464, %v551
      %v553 = vpop.f32.mrf.mxu0
      %554 = vmatprep.mubr.bf16.mxu0 0
      %555 = vmatmul.mubr.bf16.gmra.mxu0 %v440
      %v556 = vpop.f32.mrf.mxu0
      %v557 = vadd.f32 %v464, %v556
      %v558 = vpop.f32.mrf.mxu0
      %v559 = vpop.f32.mrf.mxu0
      %v560 = vadd.f32 %v464, %v559
      %v561 = vpop.f32.mrf.mxu0
      %562 = vmatprep.mubr.bf16.mxu0 0
      %563 = vmatmul.mubr.bf16.gmra.mxu0 %v441
      %v564 = vpop.f32.mrf.mxu0
      %v565 = vadd.f32 %v464, %v564
      %v566 = vpop.f32.mrf.mxu0
      %v567 = vpop.f32.mrf.mxu0
      %v568 = vadd.f32 %v464, %v567
      %v569 = vpop.f32.mrf.mxu0
      %570 = vmatprep.mubr.bf16.mxu0 0
      %571 = vmatmul.mubr.bf16.gmra.mxu0 %v442
      %v572 = vpop.f32.mrf.mxu0
      %v573 = vadd.f32 %v464, %v572
      %v574 = vpop.f32.mrf.mxu0
      %v575 = vpop.f32.mrf.mxu0
      %v576 = vadd.f32 %v464, %v575
      %v577 = vpop.f32.mrf.mxu0
      %578 = vdwg.mxu0
      %v579 = vmax.f32 %v549, 0.0
      %v580 = vmax.f32 %v552, 0.0
      %v581 = vmax.f32 %v557, 0.0
      %v582 = vmax.f32 %v560, 0.0
      %v583 = vmax.f32 %v565, 0.0
      %v584 = vmax.f32 %v568, 0.0
      %v585 = vmax.f32 %v573, 0.0
      %v586 = vmax.f32 %v576, 0.0
      %v587 = vpack.c.bf16 %v580, %v579
      %v588 = vpack.c.bf16 %v582, %v581
      %v589 = vpack.c.bf16 %v584, %v583
      %v590 = vpack.c.bf16 %v586, %v585
      %v591 = vld [vmem:[%s5] sm:$0xf]
      %v592 = vld [vmem:[%s5 + $0x4] sm:$0xf]
      %v593 = vld [vmem:[%s5 + $0x8] sm:$0xf]
      %v594 = vld [vmem:[%s5 + $0xc] sm:$0xf]
      %v595 = vld [vmem:[%s5 + $0x10] sm:$0xf]
      %v596 = vld [vmem:[%s5 + $0x14] sm:$0xf]
      %v597 = vld [vmem:[%s5 + $0x18] sm:$0xf]
      %v598 = vld [vmem:[%s5 + $0x1c] sm:$0xf]
      %v599 = vld [vmem:[%s5 + $0x20] sm:$0xf]
      %v600 = vld [vmem:[%s5 + $0x24] sm:$0xf]
      %v601 = vld [vmem:[%s5 + $0x28] sm:$0xf]
      %v602 = vld [vmem:[%s5 + $0x2c] sm:$0xf]
      %v603 = vld [vmem:[%s5 + $0x30] sm:$0xf]
      %v604 = vld [vmem:[%s5 + $0x34] sm:$0xf]
      %v605 = vld [vmem:[%s5 + $0x38] sm:$0xf]
      %v606 = vld [vmem:[%s5 + $0x3c] sm:$0xf]
      %v607 = vld [vmem:[%s6] sm:$0x1]
      %v609 = vlaneseq
      %v610 = vshrl.u32 %v609, 7
      %v611 = vsub.s32 0, %v610
      %v612 = vrot.slane %v607, %v611
      %v630 = vunpack.c.l.b16 %v591
      %v631 = vunpack.c.l.b16 %v592
      %v632 = vunpack.c.l.b16 %v593
      %v633 = vunpack.c.l.b16 %v594
      %v634 = vunpack.c.l.b16 %v595
      %v635 = vunpack.c.l.b16 %v596
      %v636 = vunpack.c.l.b16 %v597
      %v637 = vunpack.c.l.b16 %v598
      %v638 = vunpack.c.l.b16 %v599
      %v639 = vunpack.c.l.b16 %v600
      %v640 = vunpack.c.l.b16 %v601
      %v641 = vunpack.c.l.b16 %v602
      %v642 = vunpack.c.l.b16 %v603
      %v643 = vunpack.c.l.b16 %v604
      %v644 = vunpack.c.l.b16 %v605
      %v645 = vunpack.c.l.b16 %v606
      %v646 = vpack.c.b16 %v631, %v630
      %v647 = vpack.c.b16 %v633, %v632
      %v648 = vpack.c.b16 %v635, %v634
      %v649 = vpack.c.b16 %v637, %v636
      %v650 = vpack.c.b16 %v639, %v638
      %v651 = vpack.c.b16 %v641, %v640
      %v652 = vpack.c.b16 %v643, %v642
      %v653 = vpack.c.b16 %v645, %v644
      %662 = vmatprep.subr.bf16.mxu0 0
      %663 = vmatpush1.bf16.msra.mxu0 %v653
      %664 = vmatprep.subr.bf16.mxu0 0
      %665 = vmatpush1.bf16.msra.mxu0 %v652
      %666 = vmatprep.subr.bf16.mxu0 0
      %667 = vmatpush1.bf16.msra.mxu0 %v651
      %668 = vmatprep.subr.bf16.mxu0 0
      %669 = vmatpush1.bf16.msra.mxu0 %v650
      %670 = vmatprep.subr.bf16.mxu0 0
      %671 = vmatpush1.bf16.msra.mxu0 %v649
      %672 = vmatprep.subr.bf16.mxu0 0
      %673 = vmatpush1.bf16.msra.mxu0 %v648
      %674 = vmatprep.subr.bf16.mxu0 0
      %675 = vmatpush1.bf16.msra.mxu0 %v647
      %676 = vmatprep.subr.bf16.mxu0 0
      %677 = vmatpush1.bf16.msra.mxu0 %v646
      %678 = vmatprep.subr.bf16.mxu0 0
      %679 = vmatpush2.bf16.msra.mxu0 0
      %680 = vmatprep.subr.bf16.mxu0 0
      %681 = vmatpush2.bf16.msra.mxu0 0
      %682 = vmatprep.subr.bf16.mxu0 0
      %683 = vmatpush2.bf16.msra.mxu0 0
      %684 = vmatprep.subr.bf16.mxu0 0
      %685 = vmatpush2.bf16.msra.mxu0 0
      %686 = vmatprep.subr.bf16.mxu0 0
      %687 = vmatpush2.bf16.msra.mxu0 0
      %688 = vmatprep.subr.bf16.mxu0 0
      %689 = vmatpush2.bf16.msra.mxu0 0
      %690 = vmatprep.subr.bf16.mxu0 0
      %691 = vmatpush2.bf16.msra.mxu0 0
      %692 = vmatprep.subr.bf16.mxu0 0
      %693 = vmatpush2.bf16.msra.mxu0 0
      %694 = vmatprep.mubr.bf16.mxu0 0
      %695 = vmatmul.mubr.bf16.gmra.mxu0 %v587
      %v696 = vpop.f32.mrf.mxu0
      %v697 = vadd.f32 %v612, %v696
      %v698 = vpop.f32.mrf.mxu0
      %v699 = vpop.f32.mrf.mxu0
      %v700 = vadd.f32 %v612, %v699
      %v701 = vpop.f32.mrf.mxu0
      %702 = vmatprep.mubr.bf16.mxu0 0
      %703 = vmatmul.mubr.bf16.gmra.mxu0 %v588
      %v704 = vpop.f32.mrf.mxu0
      %v705 = vadd.f32 %v612, %v704
      %v706 = vpop.f32.mrf.mxu0
      %v707 = vpop.f32.mrf.mxu0
      %v708 = vadd.f32 %v612, %v707
      %v709 = vpop.f32.mrf.mxu0
      %710 = vmatprep.mubr.bf16.mxu0 0
      %711 = vmatmul.mubr.bf16.gmra.mxu0 %v589
      %v712 = vpop.f32.mrf.mxu0
      %v713 = vadd.f32 %v612, %v712
      %v714 = vpop.f32.mrf.mxu0
      %v715 = vpop.f32.mrf.mxu0
      %v716 = vadd.f32 %v612, %v715
      %v717 = vpop.f32.mrf.mxu0
      %718 = vmatprep.mubr.bf16.mxu0 0
      %719 = vmatmul.mubr.bf16.gmra.mxu0 %v590
      %v720 = vpop.f32.mrf.mxu0
      %v721 = vadd.f32 %v612, %v720
      %v722 = vpop.f32.mrf.mxu0
      %v723 = vpop.f32.mrf.mxu0
      %v724 = vadd.f32 %v612, %v723
      %v725 = vpop.f32.mrf.mxu0
      %726 = vdwg.mxu0
      %727 = vst [vmem:[%s280] sm:$0xff] %v697
      %728 = vst [vmem:[%s280 + $0x8] sm:$0xff] %v700
      %729 = vst [vmem:[%s280 + $0x10] sm:$0xff] %v705
      %730 = vst [vmem:[%s280 + $0x18] sm:$0xff] %v708
      %731 = vst [vmem:[%s280 + $0x20] sm:$0xff] %v713
      %732 = vst [vmem:[%s280 + $0x28] sm:$0xff] %v716
      %733 = vst [vmem:[%s280 + $0x30] sm:$0xff] %v721
      %734 = vst [vmem:[%s280 + $0x38] sm:$0xff] %v724
      %s735 = smul.u32 8, %s18
      %p736 = scmp.lt.s32.totalorder %s735, 31
      %s737 = scalar_select %p736, %s735, 31
      %s738 = smul.addr %s737, 8
      %s739 = scalar_lea.vmem %s7, %s738
      // Predicated region
      $region49: #{feedforward_nn.1} parent=47 // pred_check
        %p740 = pneg %p188
      $region50: #{feedforward_nn.1} parent=47 // pred_check_branch
        %742 = sbr.rel (%p740) target = $region52
      $region51: #{feedforward_nn.1} parent=47 // pred_region
        %s743 = smul.u32 8, %s18
      $region52: #{feedforward_nn.1} parent=47 // pred_fallthru
        _
    $region48: #{feedforward_nn.1} parent=5 // pred_fallthru
      _
    %p744 = scmp.le.s32.totalorder 2, %s13
    // Predicated region
    $region53: #{feedforward_nn.1} parent=5 // pred_check
      %p745 = pneg %p744
    $region54: #{feedforward_nn.1} parent=5 // pred_check_branch
      %747 = sbr.rel (%p745) target = $region56
    $region55: #{feedforward_nn.1} parent=5 // pred_region
      %s748 = ssub.s32 %s13, 2
      // Predicated region
      $region57: #{feedforward_nn.1} parent=55 // pred_check
        %p749 = pneg %p194
      $region58: #{feedforward_nn.1} parent=55 // pred_check_branch
        %751 = sbr.rel (%p749) target = $region60
      $region59: #{feedforward_nn.1} parent=55 // pred_region
        %s752 = smul.u32 8, %s19
        %p753 = scmp.lt.s32.totalorder %s752, 31
        %s754 = scalar_select %p753, %s752, 31
        %s755 = smul.addr %s754, 8
        %s756 = scalar_lea.vmem %s7, %s755
      $region60: #{feedforward_nn.1} parent=55 // pred_fallthru
        _
    $region56: #{feedforward_nn.1} parent=5 // pred_fallthru
      _
  $region6: #{feedforward_nn.1} parent=0 // loop_footer
    %s17 = sadd.s32 1, %s13
  $region7: #{feedforward_nn.1} parent=0 // loop_footer_branch
    %12 = sbr.rel target = $region3
  $region8: #{feedforward_nn.1} parent=0 // loop_exit
    _

</llo_original>
